<compile_context>
chip_gen: v6e
topology: v6e:2x2x1
jax: 0.10.0
libtpu: 0.0.40
codegen_flags: <defaults>
</compile_context>

<pallas_src>
import jax
import jax.numpy as jnp
from jax.experimental import pallas as pl
from jax.experimental.pallas import tpu as pltpu


def _pair(v):
    if isinstance(v, (tuple, list)):
        return int(v[0]), int(v[1])
    return int(v), int(v)


def _channel_tile(c, cap=8):
    """Largest divisor of c that is <= cap (bounds static unroll in-kernel)."""
    ct = 1
    for d in range(1, min(c, cap) + 1):
        if c % d == 0:
            ct = d
    return ct


def _make_unfold_kernel(ct, kh, kw, out_h, out_w, sh, sw):
    kk = kh * kw

    def kernel(x_ref, o_ref):
        # x_ref: (1, ct, Hp, Wp)  zero-padded input channels (VMEM tile)
        # o_ref: (1, ct*kh*kw, out_h, out_w)
        for c in range(ct):
            plane = x_ref[0, c]                       # (Hp, Wp), loaded once
            for i in range(kh):
                for j in range(kw):
                    # shifted (and possibly strided) window built in VMEM
                    win = plane[i:i + (out_h - 1) * sh + 1:sh,
                                j:j + (out_w - 1) * sw + 1:sw]
                    o_ref[0, c * kk + i * kw + j] = win

    return kernel


def conv2lstm_forward(x_nchw, kernel_size, padding, stride):
    """Exactly F.unfold(...) followed by .reshape((B, C*kh*kw, height, -1))."""
    kh, kw = _pair(kernel_size)
    ph, pw = _pair(padding)
    sh, sw = _pair(stride)
    b, c, h, w = x_nchw.shape
    out_h = (h + 2 * ph - kh) // sh + 1
    out_w = (w + 2 * pw - kw) // sw + 1
    hp, wp = h + 2 * ph, w + 2 * pw
    kk = kh * kw

    xp = jnp.pad(x_nchw, ((0, 0), (0, 0), (ph, ph), (pw, pw)))

    ct = _channel_tile(c)

    unfolded = pl.pallas_call(
        _make_unfold_kernel(ct, kh, kw, out_h, out_w, sh, sw),
        out_shape=jax.ShapeDtypeStruct((b, c * kk, out_h, out_w), x_nchw.dtype),
        grid_spec=pltpu.PrefetchScalarGridSpec(
            num_scalar_prefetch=0,
            grid=(b, c // ct),
            in_specs=[
                pl.BlockSpec((1, ct, hp, wp), lambda bi, ci: (bi, ci, 0, 0)),
            ],
            out_specs=pl.BlockSpec(
                (1, ct * kk, out_h, out_w), lambda bi, ci: (bi, ci, 0, 0)
            ),
        ),
        compiler_params=pltpu.CompilerParams(
            dimension_semantics=("parallel", "parallel"),
        ),
    )(xp)

    # PyTorch module: reshape((B, C*kh*kw, height, -1)); with the CTPN config
    # (k=3, pad=1, stride=1) out_h == height and this is a no-op metadata view.
    height = h
    l = out_h * out_w
    assert l % height == 0, "conv2lstm reshape requires L divisible by input height"
    return unfolded.reshape(b, c * kk, height, l // height)


# ----------------------------------------------------------------------------
# Pure-JAX reference (mirrors F.unfold semantics) for validation.
# ----------------------------------------------------------------------------
def conv2lstm_ref(x, kernel_size, padding, stride):
    kh, kw = _pair(kernel_size)
    ph, pw = _pair(padding)
    sh, sw = _pair(stride)
    b, c, h, w = x.shape
    xp = jnp.pad(x, ((0, 0), (0, 0), (ph, ph), (pw, pw)))
    out_h = (h + 2 * ph - kh) // sh + 1
    out_w = (w + 2 * pw - kw) // sw + 1
    cols = []
    for ci in range(c):          # PyTorch unfold ordering: channel-major, then kh, kw
        for i in range(kh):
            for j in range(kw):
                cols.append(
                    xp[:, ci,
                       i:i + (out_h - 1) * sh + 1:sh,
                       j:j + (out_w - 1) * sw + 1:sw]
                )
    col = jnp.stack(cols, axis=1)            # (B, C*kh*kw, out_h, out_w)
    return col.reshape(b, c * kh * kw, h, -1)


if __name__ == "__main__":
    key = jax.random.PRNGKey(0)
    # Small shapes consistent with the module: N=2, C=4, 16x16 spatial.
    x = jax.random.normal(key, (2, 4, 16, 16), jnp.float32)

    # CTPN uses conv2lstm(kernel_size=3, padding=1, stride=1).
    fwd = jax.jit(lambda inp: conv2lstm_forward(inp, kernel_size=3, padding=1, stride=1))
    out = fwd(x)
    jax.block_until_ready(out)

    ref = conv2lstm_ref(x, 3, 1, 1)
    assert out.shape == (2, 4 * 9, 16, 16), out.shape
    assert out.dtype == x.dtype
    # Pure data movement: results must match the reference exactly.
    assert bool(jnp.all(out == ref))
    print("KERNEL_OK")
</pallas_src>

<mosaic_0001>
module attributes {stable_mosaic.version = 11 : i64} {
  func.func @kernel(%arg0: i32, %arg1: i32, %arg2: memref<1x4x18x18xf32, #tpu.memory_space<vmem>>, %arg3: memref<1x36x16x16xf32, #tpu.memory_space<vmem>>) attributes {dimension_semantics = [#tpu.dimension_semantics<parallel>, #tpu.dimension_semantics<parallel>], iteration_bounds = array<i64: 2, 1>, scalar_prefetch = 0 : i64, scratch_operands = 0 : i64, tpu.core_type = #tpu.core_type<tc>, window_params = [{transform_indices = @transform_0, window_bounds = array<i64: 1, 4, 18, 18>}, {transform_indices = @transform_1, window_bounds = array<i64: 1, 36, 16, 16>}]} {
    %c0 = arith.constant 0 : index
    %c0_0 = arith.constant 0 : index
    %c0_1 = arith.constant 0 : index
    %c0_2 = arith.constant 0 : index
    %0 = vector.load %arg2[%c0, %c0_0, %c0_1, %c0_2] : memref<1x4x18x18xf32, #tpu.memory_space<vmem>>, vector<1x1x18x18xf32>
    %1 = vector.shape_cast %0 : vector<1x1x18x18xf32> to vector<18x18xf32>
    %2 = vector.extract_strided_slice %1 {offsets = [0, 0], sizes = [16, 16], strides = [1, 1]} : vector<18x18xf32> to vector<16x16xf32>
    %c0_3 = arith.constant 0 : index
    %c0_4 = arith.constant 0 : index
    %c0_5 = arith.constant 0 : index
    %c0_6 = arith.constant 0 : index
    %3 = vector.load %arg3[%c0_3, %c0_4, %c0_5, %c0_6] : memref<1x36x16x16xf32, #tpu.memory_space<vmem>>, vector<1x1x16x16xf32>
    %4 = vector.shape_cast %3 : vector<1x1x16x16xf32> to vector<16x16xf32>
    %5 = vector.shape_cast %2 : vector<16x16xf32> to vector<1x1x16x16xf32>
    tpu.vector_store %arg3[%c0_3, %c0_4, %c0_5, %c0_6], %5 {strides = array<i32>} : memref<1x36x16x16xf32, #tpu.memory_space<vmem>>, vector<1x1x16x16xf32>,
    %6 = vector.extract_strided_slice %1 {offsets = [0, 1], sizes = [16, 16], strides = [1, 1]} : vector<18x18xf32> to vector<16x16xf32>
    %c0_7 = arith.constant 0 : index
    %c1 = arith.constant 1 : index
    %c0_8 = arith.constant 0 : index
    %c0_9 = arith.constant 0 : index
    %7 = vector.load %arg3[%c0_7, %c1, %c0_8, %c0_9] : memref<1x36x16x16xf32, #tpu.memory_space<vmem>>, vector<1x1x16x16xf32>
    %8 = vector.shape_cast %7 : vector<1x1x16x16xf32> to vector<16x16xf32>
    %9 = vector.shape_cast %6 : vector<16x16xf32> to vector<1x1x16x16xf32>
    tpu.vector_store %arg3[%c0_7, %c1, %c0_8, %c0_9], %9 {strides = array<i32>} : memref<1x36x16x16xf32, #tpu.memory_space<vmem>>, vector<1x1x16x16xf32>,
    %10 = vector.extract_strided_slice %1 {offsets = [0, 2], sizes = [16, 16], strides = [1, 1]} : vector<18x18xf32> to vector<16x16xf32>
    %c0_10 = arith.constant 0 : index
    %c2 = arith.constant 2 : index
    %c0_11 = arith.constant 0 : index
    %c0_12 = arith.constant 0 : index
    %11 = vector.load %arg3[%c0_10, %c2, %c0_11, %c0_12] : memref<1x36x16x16xf32, #tpu.memory_space<vmem>>, vector<1x1x16x16xf32>
    %12 = vector.shape_cast %11 : vector<1x1x16x16xf32> to vector<16x16xf32>
    %13 = vector.shape_cast %10 : vector<16x16xf32> to vector<1x1x16x16xf32>
    tpu.vector_store %arg3[%c0_10, %c2, %c0_11, %c0_12], %13 {strides = array<i32>} : memref<1x36x16x16xf32, #tpu.memory_space<vmem>>, vector<1x1x16x16xf32>,
    %14 = vector.extract_strided_slice %1 {offsets = [1, 0], sizes = [16, 16], strides = [1, 1]} : vector<18x18xf32> to vector<16x16xf32>
    %c0_13 = arith.constant 0 : index
    %c3 = arith.constant 3 : index
    %c0_14 = arith.constant 0 : index
    %c0_15 = arith.constant 0 : index
    %15 = vector.load %arg3[%c0_13, %c3, %c0_14, %c0_15] : memref<1x36x16x16xf32, #tpu.memory_space<vmem>>, vector<1x1x16x16xf32>
    %16 = vector.shape_cast %15 : vector<1x1x16x16xf32> to vector<16x16xf32>
    %17 = vector.shape_cast %14 : vector<16x16xf32> to vector<1x1x16x16xf32>
    tpu.vector_store %arg3[%c0_13, %c3, %c0_14, %c0_15], %17 {strides = array<i32>} : memref<1x36x16x16xf32, #tpu.memory_space<vmem>>, vector<1x1x16x16xf32>,
    %18 = vector.extract_strided_slice %1 {offsets = [1, 1], sizes = [16, 16], strides = [1, 1]} : vector<18x18xf32> to vector<16x16xf32>
    %c0_16 = arith.constant 0 : index
    %c4 = arith.constant 4 : index
    %c0_17 = arith.constant 0 : index
    %c0_18 = arith.constant 0 : index
    %19 = vector.load %arg3[%c0_16, %c4, %c0_17, %c0_18] : memref<1x36x16x16xf32, #tpu.memory_space<vmem>>, vector<1x1x16x16xf32>
    %20 = vector.shape_cast %19 : vector<1x1x16x16xf32> to vector<16x16xf32>
    %21 = vector.shape_cast %18 : vector<16x16xf32> to vector<1x1x16x16xf32>
    tpu.vector_store %arg3[%c0_16, %c4, %c0_17, %c0_18], %21 {strides = array<i32>} : memref<1x36x16x16xf32, #tpu.memory_space<vmem>>, vector<1x1x16x16xf32>,
    %22 = vector.extract_strided_slice %1 {offsets = [1, 2], sizes = [16, 16], strides = [1, 1]} : vector<18x18xf32> to vector<16x16xf32>
    %c0_19 = arith.constant 0 : index
    %c5 = arith.constant 5 : index
    %c0_20 = arith.constant 0 : index
    %c0_21 = arith.constant 0 : index
    %23 = vector.load %arg3[%c0_19, %c5, %c0_20, %c0_21] : memref<1x36x16x16xf32, #tpu.memory_space<vmem>>, vector<1x1x16x16xf32>
    %24 = vector.shape_cast %23 : vector<1x1x16x16xf32> to vector<16x16xf32>
    %25 = vector.shape_cast %22 : vector<16x16xf32> to vector<1x1x16x16xf32>
    tpu.vector_store %arg3[%c0_19, %c5, %c0_20, %c0_21], %25 {strides = array<i32>} : memref<1x36x16x16xf32, #tpu.memory_space<vmem>>, vector<1x1x16x16xf32>,
    %26 = vector.extract_strided_slice %1 {offsets = [2, 0], sizes = [16, 16], strides = [1, 1]} : vector<18x18xf32> to vector<16x16xf32>
    %c0_22 = arith.constant 0 : index
    %c6 = arith.constant 6 : index
    %c0_23 = arith.constant 0 : index
    %c0_24 = arith.constant 0 : index
    %27 = vector.load %arg3[%c0_22, %c6, %c0_23, %c0_24] : memref<1x36x16x16xf32, #tpu.memory_space<vmem>>, vector<1x1x16x16xf32>
    %28 = vector.shape_cast %27 : vector<1x1x16x16xf32> to vector<16x16xf32>
    %29 = vector.shape_cast %26 : vector<16x16xf32> to vector<1x1x16x16xf32>
    tpu.vector_store %arg3[%c0_22, %c6, %c0_23, %c0_24], %29 {strides = array<i32>} : memref<1x36x16x16xf32, #tpu.memory_space<vmem>>, vector<1x1x16x16xf32>,
    %30 = vector.extract_strided_slice %1 {offsets = [2, 1], sizes = [16, 16], strides = [1, 1]} : vector<18x18xf32> to vector<16x16xf32>
    %c0_25 = arith.constant 0 : index
    %c7 = arith.constant 7 : index
    %c0_26 = arith.constant 0 : index
    %c0_27 = arith.constant 0 : index
    %31 = vector.load %arg3[%c0_25, %c7, %c0_26, %c0_27] : memref<1x36x16x16xf32, #tpu.memory_space<vmem>>, vector<1x1x16x16xf32>
    %32 = vector.shape_cast %31 : vector<1x1x16x16xf32> to vector<16x16xf32>
    %33 = vector.shape_cast %30 : vector<16x16xf32> to vector<1x1x16x16xf32>
    tpu.vector_store %arg3[%c0_25, %c7, %c0_26, %c0_27], %33 {strides = array<i32>} : memref<1x36x16x16xf32, #tpu.memory_space<vmem>>, vector<1x1x16x16xf32>,
    %34 = vector.extract_strided_slice %1 {offsets = [2, 2], sizes = [16, 16], strides = [1, 1]} : vector<18x18xf32> to vector<16x16xf32>
    %c0_28 = arith.constant 0 : index
    %c8 = arith.constant 8 : index
    %c0_29 = arith.constant 0 : index
    %c0_30 = arith.constant 0 : index
    %35 = vector.load %arg3[%c0_28, %c8, %c0_29, %c0_30] : memref<1x36x16x16xf32, #tpu.memory_space<vmem>>, vector<1x1x16x16xf32>
    %36 = vector.shape_cast %35 : vector<1x1x16x16xf32> to vector<16x16xf32>
    %37 = vector.shape_cast %34 : vector<16x16xf32> to vector<1x1x16x16xf32>
    tpu.vector_store %arg3[%c0_28, %c8, %c0_29, %c0_30], %37 {strides = array<i32>} : memref<1x36x16x16xf32, #tpu.memory_space<vmem>>, vector<1x1x16x16xf32>,
    %c0_31 = arith.constant 0 : index
    %c1_32 = arith.constant 1 : index
    %c0_33 = arith.constant 0 : index
    %c0_34 = arith.constant 0 : index
    %38 = vector.load %arg2[%c0_31, %c1_32, %c0_33, %c0_34] : memref<1x4x18x18xf32, #tpu.memory_space<vmem>>, vector<1x1x18x18xf32>
    %39 = vector.shape_cast %38 : vector<1x1x18x18xf32> to vector<18x18xf32>
    %40 = vector.extract_strided_slice %39 {offsets = [0, 0], sizes = [16, 16], strides = [1, 1]} : vector<18x18xf32> to vector<16x16xf32>
    %c0_35 = arith.constant 0 : index
    %c9 = arith.constant 9 : index
    %c0_36 = arith.constant 0 : index
    %c0_37 = arith.constant 0 : index
    %41 = vector.load %arg3[%c0_35, %c9, %c0_36, %c0_37] : memref<1x36x16x16xf32, #tpu.memory_space<vmem>>, vector<1x1x16x16xf32>
    %42 = vector.shape_cast %41 : vector<1x1x16x16xf32> to vector<16x16xf32>
    %43 = vector.shape_cast %40 : vector<16x16xf32> to vector<1x1x16x16xf32>
    tpu.vector_store %arg3[%c0_35, %c9, %c0_36, %c0_37], %43 {strides = array<i32>} : memref<1x36x16x16xf32, #tpu.memory_space<vmem>>, vector<1x1x16x16xf32>,
    %44 = vector.extract_strided_slice %39 {offsets = [0, 1], sizes = [16, 16], strides = [1, 1]} : vector<18x18xf32> to vector<16x16xf32>
    %c0_38 = arith.constant 0 : index
    %c10 = arith.constant 10 : index
    %c0_39 = arith.constant 0 : index
    %c0_40 = arith.constant 0 : index
    %45 = vector.load %arg3[%c0_38, %c10, %c0_39, %c0_40] : memref<1x36x16x16xf32, #tpu.memory_space<vmem>>, vector<1x1x16x16xf32>
    %46 = vector.shape_cast %45 : vector<1x1x16x16xf32> to vector<16x16xf32>
    %47 = vector.shape_cast %44 : vector<16x16xf32> to vector<1x1x16x16xf32>
    tpu.vector_store %arg3[%c0_38, %c10, %c0_39, %c0_40], %47 {strides = array<i32>} : memref<1x36x16x16xf32, #tpu.memory_space<vmem>>, vector<1x1x16x16xf32>,
    %48 = vector.extract_strided_slice %39 {offsets = [0, 2], sizes = [16, 16], strides = [1, 1]} : vector<18x18xf32> to vector<16x16xf32>
    %c0_41 = arith.constant 0 : index
    %c11 = arith.constant 11 : index
    %c0_42 = arith.constant 0 : index
    %c0_43 = arith.constant 0 : index
    %49 = vector.load %arg3[%c0_41, %c11, %c0_42, %c0_43] : memref<1x36x16x16xf32, #tpu.memory_space<vmem>>, vector<1x1x16x16xf32>
    %50 = vector.shape_cast %49 : vector<1x1x16x16xf32> to vector<16x16xf32>
    %51 = vector.shape_cast %48 : vector<16x16xf32> to vector<1x1x16x16xf32>
    tpu.vector_store %arg3[%c0_41, %c11, %c0_42, %c0_43], %51 {strides = array<i32>} : memref<1x36x16x16xf32, #tpu.memory_space<vmem>>, vector<1x1x16x16xf32>,
    %52 = vector.extract_strided_slice %39 {offsets = [1, 0], sizes = [16, 16], strides = [1, 1]} : vector<18x18xf32> to vector<16x16xf32>
    %c0_44 = arith.constant 0 : index
    %c12 = arith.constant 12 : index
    %c0_45 = arith.constant 0 : index
    %c0_46 = arith.constant 0 : index
    %53 = vector.load %arg3[%c0_44, %c12, %c0_45, %c0_46] : memref<1x36x16x16xf32, #tpu.memory_space<vmem>>, vector<1x1x16x16xf32>
    %54 = vector.shape_cast %53 : vector<1x1x16x16xf32> to vector<16x16xf32>
    %55 = vector.shape_cast %52 : vector<16x16xf32> to vector<1x1x16x16xf32>
    tpu.vector_store %arg3[%c0_44, %c12, %c0_45, %c0_46], %55 {strides = array<i32>} : memref<1x36x16x16xf32, #tpu.memory_space<vmem>>, vector<1x1x16x16xf32>,
    %56 = vector.extract_strided_slice %39 {offsets = [1, 1], sizes = [16, 16], strides = [1, 1]} : vector<18x18xf32> to vector<16x16xf32>
    %c0_47 = arith.constant 0 : index
    %c13 = arith.constant 13 : index
    %c0_48 = arith.constant 0 : index
    %c0_49 = arith.constant 0 : index
    %57 = vector.load %arg3[%c0_47, %c13, %c0_48, %c0_49] : memref<1x36x16x16xf32, #tpu.memory_space<vmem>>, vector<1x1x16x16xf32>
    %58 = vector.shape_cast %57 : vector<1x1x16x16xf32> to vector<16x16xf32>
    %59 = vector.shape_cast %56 : vector<16x16xf32> to vector<1x1x16x16xf32>
    tpu.vector_store %arg3[%c0_47, %c13, %c0_48, %c0_49], %59 {strides = array<i32>} : memref<1x36x16x16xf32, #tpu.memory_space<vmem>>, vector<1x1x16x16xf32>,
    %60 = vector.extract_strided_slice %39 {offsets = [1, 2], sizes = [16, 16], strides = [1, 1]} : vector<18x18xf32> to vector<16x16xf32>
    %c0_50 = arith.constant 0 : index
    %c14 = arith.constant 14 : index
    %c0_51 = arith.constant 0 : index
    %c0_52 = arith.constant 0 : index
    %61 = vector.load %arg3[%c0_50, %c14, %c0_51, %c0_52] : memref<1x36x16x16xf32, #tpu.memory_space<vmem>>, vector<1x1x16x16xf32>
    %62 = vector.shape_cast %61 : vector<1x1x16x16xf32> to vector<16x16xf32>
    %63 = vector.shape_cast %60 : vector<16x16xf32> to vector<1x1x16x16xf32>
    tpu.vector_store %arg3[%c0_50, %c14, %c0_51, %c0_52], %63 {strides = array<i32>} : memref<1x36x16x16xf32, #tpu.memory_space<vmem>>, vector<1x1x16x16xf32>,
    %64 = vector.extract_strided_slice %39 {offsets = [2, 0], sizes = [16, 16], strides = [1, 1]} : vector<18x18xf32> to vector<16x16xf32>
    %c0_53 = arith.constant 0 : index
    %c15 = arith.constant 15 : index
    %c0_54 = arith.constant 0 : index
    %c0_55 = arith.constant 0 : index
    %65 = vector.load %arg3[%c0_53, %c15, %c0_54, %c0_55] : memref<1x36x16x16xf32, #tpu.memory_space<vmem>>, vector<1x1x16x16xf32>
    %66 = vector.shape_cast %65 : vector<1x1x16x16xf32> to vector<16x16xf32>
    %67 = vector.shape_cast %64 : vector<16x16xf32> to vector<1x1x16x16xf32>
    tpu.vector_store %arg3[%c0_53, %c15, %c0_54, %c0_55], %67 {strides = array<i32>} : memref<1x36x16x16xf32, #tpu.memory_space<vmem>>, vector<1x1x16x16xf32>,
    %68 = vector.extract_strided_slice %39 {offsets = [2, 1], sizes = [16, 16], strides = [1, 1]} : vector<18x18xf32> to vector<16x16xf32>
    %c0_56 = arith.constant 0 : index
    %c16 = arith.constant 16 : index
    %c0_57 = arith.constant 0 : index
    %c0_58 = arith.constant 0 : index
    %69 = vector.load %arg3[%c0_56, %c16, %c0_57, %c0_58] : memref<1x36x16x16xf32, #tpu.memory_space<vmem>>, vector<1x1x16x16xf32>
    %70 = vector.shape_cast %69 : vector<1x1x16x16xf32> to vector<16x16xf32>
    %71 = vector.shape_cast %68 : vector<16x16xf32> to vector<1x1x16x16xf32>
    tpu.vector_store %arg3[%c0_56, %c16, %c0_57, %c0_58], %71 {strides = array<i32>} : memref<1x36x16x16xf32, #tpu.memory_space<vmem>>, vector<1x1x16x16xf32>,
    %72 = vector.extract_strided_slice %39 {offsets = [2, 2], sizes = [16, 16], strides = [1, 1]} : vector<18x18xf32> to vector<16x16xf32>
    %c0_59 = arith.constant 0 : index
    %c17 = arith.constant 17 : index
    %c0_60 = arith.constant 0 : index
    %c0_61 = arith.constant 0 : index
    %73 = vector.load %arg3[%c0_59, %c17, %c0_60, %c0_61] : memref<1x36x16x16xf32, #tpu.memory_space<vmem>>, vector<1x1x16x16xf32>
    %74 = vector.shape_cast %73 : vector<1x1x16x16xf32> to vector<16x16xf32>
    %75 = vector.shape_cast %72 : vector<16x16xf32> to vector<1x1x16x16xf32>
    tpu.vector_store %arg3[%c0_59, %c17, %c0_60, %c0_61], %75 {strides = array<i32>} : memref<1x36x16x16xf32, #tpu.memory_space<vmem>>, vector<1x1x16x16xf32>,
    %c0_62 = arith.constant 0 : index
    %c2_63 = arith.constant 2 : index
    %c0_64 = arith.constant 0 : index
    %c0_65 = arith.constant 0 : index
    %76 = vector.load %arg2[%c0_62, %c2_63, %c0_64, %c0_65] : memref<1x4x18x18xf32, #tpu.memory_space<vmem>>, vector<1x1x18x18xf32>
    %77 = vector.shape_cast %76 : vector<1x1x18x18xf32> to vector<18x18xf32>
    %78 = vector.extract_strided_slice %77 {offsets = [0, 0], sizes = [16, 16], strides = [1, 1]} : vector<18x18xf32> to vector<16x16xf32>
    %c0_66 = arith.constant 0 : index
    %c18 = arith.constant 18 : index
    %c0_67 = arith.constant 0 : index
    %c0_68 = arith.constant 0 : index
    %79 = vector.load %arg3[%c0_66, %c18, %c0_67, %c0_68] : memref<1x36x16x16xf32, #tpu.memory_space<vmem>>, vector<1x1x16x16xf32>
    %80 = vector.shape_cast %79 : vector<1x1x16x16xf32> to vector<16x16xf32>
    %81 = vector.shape_cast %78 : vector<16x16xf32> to vector<1x1x16x16xf32>
    tpu.vector_store %arg3[%c0_66, %c18, %c0_67, %c0_68], %81 {strides = array<i32>} : memref<1x36x16x16xf32, #tpu.memory_space<vmem>>, vector<1x1x16x16xf32>,
    %82 = vector.extract_strided_slice %77 {offsets = [0, 1], sizes = [16, 16], strides = [1, 1]} : vector<18x18xf32> to vector<16x16xf32>
    %c0_69 = arith.constant 0 : index
    %c19 = arith.constant 19 : index
    %c0_70 = arith.constant 0 : index
    %c0_71 = arith.constant 0 : index
    %83 = vector.load %arg3[%c0_69, %c19, %c0_70, %c0_71] : memref<1x36x16x16xf32, #tpu.memory_space<vmem>>, vector<1x1x16x16xf32>
    %84 = vector.shape_cast %83 : vector<1x1x16x16xf32> to vector<16x16xf32>
    %85 = vector.shape_cast %82 : vector<16x16xf32> to vector<1x1x16x16xf32>
    tpu.vector_store %arg3[%c0_69, %c19, %c0_70, %c0_71], %85 {strides = array<i32>} : memref<1x36x16x16xf32, #tpu.memory_space<vmem>>, vector<1x1x16x16xf32>,
    %86 = vector.extract_strided_slice %77 {offsets = [0, 2], sizes = [16, 16], strides = [1, 1]} : vector<18x18xf32> to vector<16x16xf32>
    %c0_72 = arith.constant 0 : index
    %c20 = arith.constant 20 : index
    %c0_73 = arith.constant 0 : index
    %c0_74 = arith.constant 0 : index
    %87 = vector.load %arg3[%c0_72, %c20, %c0_73, %c0_74] : memref<1x36x16x16xf32, #tpu.memory_space<vmem>>, vector<1x1x16x16xf32>
    %88 = vector.shape_cast %87 : vector<1x1x16x16xf32> to vector<16x16xf32>
    %89 = vector.shape_cast %86 : vector<16x16xf32> to vector<1x1x16x16xf32>
    tpu.vector_store %arg3[%c0_72, %c20, %c0_73, %c0_74], %89 {strides = array<i32>} : memref<1x36x16x16xf32, #tpu.memory_space<vmem>>, vector<1x1x16x16xf32>,
    %90 = vector.extract_strided_slice %77 {offsets = [1, 0], sizes = [16, 16], strides = [1, 1]} : vector<18x18xf32> to vector<16x16xf32>
    %c0_75 = arith.constant 0 : index
    %c21 = arith.constant 21 : index
    %c0_76 = arith.constant 0 : index
    %c0_77 = arith.constant 0 : index
    %91 = vector.load %arg3[%c0_75, %c21, %c0_76, %c0_77] : memref<1x36x16x16xf32, #tpu.memory_space<vmem>>, vector<1x1x16x16xf32>
    %92 = vector.shape_cast %91 : vector<1x1x16x16xf32> to vector<16x16xf32>
    %93 = vector.shape_cast %90 : vector<16x16xf32> to vector<1x1x16x16xf32>
    tpu.vector_store %arg3[%c0_75, %c21, %c0_76, %c0_77], %93 {strides = array<i32>} : memref<1x36x16x16xf32, #tpu.memory_space<vmem>>, vector<1x1x16x16xf32>,
    %94 = vector.extract_strided_slice %77 {offsets = [1, 1], sizes = [16, 16], strides = [1, 1]} : vector<18x18xf32> to vector<16x16xf32>
    %c0_78 = arith.constant 0 : index
    %c22 = arith.constant 22 : index
    %c0_79 = arith.constant 0 : index
    %c0_80 = arith.constant 0 : index
    %95 = vector.load %arg3[%c0_78, %c22, %c0_79, %c0_80] : memref<1x36x16x16xf32, #tpu.memory_space<vmem>>, vector<1x1x16x16xf32>
    %96 = vector.shape_cast %95 : vector<1x1x16x16xf32> to vector<16x16xf32>
    %97 = vector.shape_cast %94 : vector<16x16xf32> to vector<1x1x16x16xf32>
    tpu.vector_store %arg3[%c0_78, %c22, %c0_79, %c0_80], %97 {strides = array<i32>} : memref<1x36x16x16xf32, #tpu.memory_space<vmem>>, vector<1x1x16x16xf32>,
    %98 = vector.extract_strided_slice %77 {offsets = [1, 2], sizes = [16, 16], strides = [1, 1]} : vector<18x18xf32> to vector<16x16xf32>
    %c0_81 = arith.constant 0 : index
    %c23 = arith.constant 23 : index
    %c0_82 = arith.constant 0 : index
    %c0_83 = arith.constant 0 : index
    %99 = vector.load %arg3[%c0_81, %c23, %c0_82, %c0_83] : memref<1x36x16x16xf32, #tpu.memory_space<vmem>>, vector<1x1x16x16xf32>
    %100 = vector.shape_cast %99 : vector<1x1x16x16xf32> to vector<16x16xf32>
    %101 = vector.shape_cast %98 : vector<16x16xf32> to vector<1x1x16x16xf32>
    tpu.vector_store %arg3[%c0_81, %c23, %c0_82, %c0_83], %101 {strides = array<i32>} : memref<1x36x16x16xf32, #tpu.memory_space<vmem>>, vector<1x1x16x16xf32>,
    %102 = vector.extract_strided_slice %77 {offsets = [2, 0], sizes = [16, 16], strides = [1, 1]} : vector<18x18xf32> to vector<16x16xf32>
    %c0_84 = arith.constant 0 : index
    %c24 = arith.constant 24 : index
    %c0_85 = arith.constant 0 : index
    %c0_86 = arith.constant 0 : index
    %103 = vector.load %arg3[%c0_84, %c24, %c0_85, %c0_86] : memref<1x36x16x16xf32, #tpu.memory_space<vmem>>, vector<1x1x16x16xf32>
    %104 = vector.shape_cast %103 : vector<1x1x16x16xf32> to vector<16x16xf32>
    %105 = vector.shape_cast %102 : vector<16x16xf32> to vector<1x1x16x16xf32>
    tpu.vector_store %arg3[%c0_84, %c24, %c0_85, %c0_86], %105 {strides = array<i32>} : memref<1x36x16x16xf32, #tpu.memory_space<vmem>>, vector<1x1x16x16xf32>,
    %106 = vector.extract_strided_slice %77 {offsets = [2, 1], sizes = [16, 16], strides = [1, 1]} : vector<18x18xf32> to vector<16x16xf32>
    %c0_87 = arith.constant 0 : index
    %c25 = arith.constant 25 : index
    %c0_88 = arith.constant 0 : index
    %c0_89 = arith.constant 0 : index
    %107 = vector.load %arg3[%c0_87, %c25, %c0_88, %c0_89] : memref<1x36x16x16xf32, #tpu.memory_space<vmem>>, vector<1x1x16x16xf32>
    %108 = vector.shape_cast %107 : vector<1x1x16x16xf32> to vector<16x16xf32>
    %109 = vector.shape_cast %106 : vector<16x16xf32> to vector<1x1x16x16xf32>
    tpu.vector_store %arg3[%c0_87, %c25, %c0_88, %c0_89], %109 {strides = array<i32>} : memref<1x36x16x16xf32, #tpu.memory_space<vmem>>, vector<1x1x16x16xf32>,
    %110 = vector.extract_strided_slice %77 {offsets = [2, 2], sizes = [16, 16], strides = [1, 1]} : vector<18x18xf32> to vector<16x16xf32>
    %c0_90 = arith.constant 0 : index
    %c26 = arith.constant 26 : index
    %c0_91 = arith.constant 0 : index
    %c0_92 = arith.constant 0 : index
    %111 = vector.load %arg3[%c0_90, %c26, %c0_91, %c0_92] : memref<1x36x16x16xf32, #tpu.memory_space<vmem>>, vector<1x1x16x16xf32>
    %112 = vector.shape_cast %111 : vector<1x1x16x16xf32> to vector<16x16xf32>
    %113 = vector.shape_cast %110 : vector<16x16xf32> to vector<1x1x16x16xf32>
    tpu.vector_store %arg3[%c0_90, %c26, %c0_91, %c0_92], %113 {strides = array<i32>} : memref<1x36x16x16xf32, #tpu.memory_space<vmem>>, vector<1x1x16x16xf32>,
    %c0_93 = arith.constant 0 : index
    %c3_94 = arith.constant 3 : index
    %c0_95 = arith.constant 0 : index
    %c0_96 = arith.constant 0 : index
    %114 = vector.load %arg2[%c0_93, %c3_94, %c0_95, %c0_96] : memref<1x4x18x18xf32, #tpu.memory_space<vmem>>, vector<1x1x18x18xf32>
    %115 = vector.shape_cast %114 : vector<1x1x18x18xf32> to vector<18x18xf32>
    %116 = vector.extract_strided_slice %115 {offsets = [0, 0], sizes = [16, 16], strides = [1, 1]} : vector<18x18xf32> to vector<16x16xf32>
    %c0_97 = arith.constant 0 : index
    %c27 = arith.constant 27 : index
    %c0_98 = arith.constant 0 : index
    %c0_99 = arith.constant 0 : index
    %117 = vector.load %arg3[%c0_97, %c27, %c0_98, %c0_99] : memref<1x36x16x16xf32, #tpu.memory_space<vmem>>, vector<1x1x16x16xf32>
    %118 = vector.shape_cast %117 : vector<1x1x16x16xf32> to vector<16x16xf32>
    %119 = vector.shape_cast %116 : vector<16x16xf32> to vector<1x1x16x16xf32>
    tpu.vector_store %arg3[%c0_97, %c27, %c0_98, %c0_99], %119 {strides = array<i32>} : memref<1x36x16x16xf32, #tpu.memory_space<vmem>>, vector<1x1x16x16xf32>,
    %120 = vector.extract_strided_slice %115 {offsets = [0, 1], sizes = [16, 16], strides = [1, 1]} : vector<18x18xf32> to vector<16x16xf32>
    %c0_100 = arith.constant 0 : index
    %c28 = arith.constant 28 : index
    %c0_101 = arith.constant 0 : index
    %c0_102 = arith.constant 0 : index
    %121 = vector.load %arg3[%c0_100, %c28, %c0_101, %c0_102] : memref<1x36x16x16xf32, #tpu.memory_space<vmem>>, vector<1x1x16x16xf32>
    %122 = vector.shape_cast %121 : vector<1x1x16x16xf32> to vector<16x16xf32>
    %123 = vector.shape_cast %120 : vector<16x16xf32> to vector<1x1x16x16xf32>
    tpu.vector_store %arg3[%c0_100, %c28, %c0_101, %c0_102], %123 {strides = array<i32>} : memref<1x36x16x16xf32, #tpu.memory_space<vmem>>, vector<1x1x16x16xf32>,
    %124 = vector.extract_strided_slice %115 {offsets = [0, 2], sizes = [16, 16], strides = [1, 1]} : vector<18x18xf32> to vector<16x16xf32>
    %c0_103 = arith.constant 0 : index
    %c29 = arith.constant 29 : index
    %c0_104 = arith.constant 0 : index
    %c0_105 = arith.constant 0 : index
    %125 = vector.load %arg3[%c0_103, %c29, %c0_104, %c0_105] : memref<1x36x16x16xf32, #tpu.memory_space<vmem>>, vector<1x1x16x16xf32>
    %126 = vector.shape_cast %125 : vector<1x1x16x16xf32> to vector<16x16xf32>
    %127 = vector.shape_cast %124 : vector<16x16xf32> to vector<1x1x16x16xf32>
    tpu.vector_store %arg3[%c0_103, %c29, %c0_104, %c0_105], %127 {strides = array<i32>} : memref<1x36x16x16xf32, #tpu.memory_space<vmem>>, vector<1x1x16x16xf32>,
    %128 = vector.extract_strided_slice %115 {offsets = [1, 0], sizes = [16, 16], strides = [1, 1]} : vector<18x18xf32> to vector<16x16xf32>
    %c0_106 = arith.constant 0 : index
    %c30 = arith.constant 30 : index
    %c0_107 = arith.constant 0 : index
    %c0_108 = arith.constant 0 : index
    %129 = vector.load %arg3[%c0_106, %c30, %c0_107, %c0_108] : memref<1x36x16x16xf32, #tpu.memory_space<vmem>>, vector<1x1x16x16xf32>
    %130 = vector.shape_cast %129 : vector<1x1x16x16xf32> to vector<16x16xf32>
    %131 = vector.shape_cast %128 : vector<16x16xf32> to vector<1x1x16x16xf32>
    tpu.vector_store %arg3[%c0_106, %c30, %c0_107, %c0_108], %131 {strides = array<i32>} : memref<1x36x16x16xf32, #tpu.memory_space<vmem>>, vector<1x1x16x16xf32>,
    %132 = vector.extract_strided_slice %115 {offsets = [1, 1], sizes = [16, 16], strides = [1, 1]} : vector<18x18xf32> to vector<16x16xf32>
    %c0_109 = arith.constant 0 : index
    %c31 = arith.constant 31 : index
    %c0_110 = arith.constant 0 : index
    %c0_111 = arith.constant 0 : index
    %133 = vector.load %arg3[%c0_109, %c31, %c0_110, %c0_111] : memref<1x36x16x16xf32, #tpu.memory_space<vmem>>, vector<1x1x16x16xf32>
    %134 = vector.shape_cast %133 : vector<1x1x16x16xf32> to vector<16x16xf32>
    %135 = vector.shape_cast %132 : vector<16x16xf32> to vector<1x1x16x16xf32>
    tpu.vector_store %arg3[%c0_109, %c31, %c0_110, %c0_111], %135 {strides = array<i32>} : memref<1x36x16x16xf32, #tpu.memory_space<vmem>>, vector<1x1x16x16xf32>,
    %136 = vector.extract_strided_slice %115 {offsets = [1, 2], sizes = [16, 16], strides = [1, 1]} : vector<18x18xf32> to vector<16x16xf32>
    %c0_112 = arith.constant 0 : index
    %c32 = arith.constant 32 : index
    %c0_113 = arith.constant 0 : index
    %c0_114 = arith.constant 0 : index
    %137 = vector.load %arg3[%c0_112, %c32, %c0_113, %c0_114] : memref<1x36x16x16xf32, #tpu.memory_space<vmem>>, vector<1x1x16x16xf32>
    %138 = vector.shape_cast %137 : vector<1x1x16x16xf32> to vector<16x16xf32>
    %139 = vector.shape_cast %136 : vector<16x16xf32> to vector<1x1x16x16xf32>
    tpu.vector_store %arg3[%c0_112, %c32, %c0_113, %c0_114], %139 {strides = array<i32>} : memref<1x36x16x16xf32, #tpu.memory_space<vmem>>, vector<1x1x16x16xf32>,
    %140 = vector.extract_strided_slice %115 {offsets = [2, 0], sizes = [16, 16], strides = [1, 1]} : vector<18x18xf32> to vector<16x16xf32>
    %c0_115 = arith.constant 0 : index
    %c33 = arith.constant 33 : index
    %c0_116 = arith.constant 0 : index
    %c0_117 = arith.constant 0 : index
    %141 = vector.load %arg3[%c0_115, %c33, %c0_116, %c0_117] : memref<1x36x16x16xf32, #tpu.memory_space<vmem>>, vector<1x1x16x16xf32>
    %142 = vector.shape_cast %141 : vector<1x1x16x16xf32> to vector<16x16xf32>
    %143 = vector.shape_cast %140 : vector<16x16xf32> to vector<1x1x16x16xf32>
    tpu.vector_store %arg3[%c0_115, %c33, %c0_116, %c0_117], %143 {strides = array<i32>} : memref<1x36x16x16xf32, #tpu.memory_space<vmem>>, vector<1x1x16x16xf32>,
    %144 = vector.extract_strided_slice %115 {offsets = [2, 1], sizes = [16, 16], strides = [1, 1]} : vector<18x18xf32> to vector<16x16xf32>
    %c0_118 = arith.constant 0 : index
    %c34 = arith.constant 34 : index
    %c0_119 = arith.constant 0 : index
    %c0_120 = arith.constant 0 : index
    %145 = vector.load %arg3[%c0_118, %c34, %c0_119, %c0_120] : memref<1x36x16x16xf32, #tpu.memory_space<vmem>>, vector<1x1x16x16xf32>
    %146 = vector.shape_cast %145 : vector<1x1x16x16xf32> to vector<16x16xf32>
    %147 = vector.shape_cast %144 : vector<16x16xf32> to vector<1x1x16x16xf32>
    tpu.vector_store %arg3[%c0_118, %c34, %c0_119, %c0_120], %147 {strides = array<i32>} : memref<1x36x16x16xf32, #tpu.memory_space<vmem>>, vector<1x1x16x16xf32>,
    %148 = vector.extract_strided_slice %115 {offsets = [2, 2], sizes = [16, 16], strides = [1, 1]} : vector<18x18xf32> to vector<16x16xf32>
    %c0_121 = arith.constant 0 : index
    %c35 = arith.constant 35 : index
    %c0_122 = arith.constant 0 : index
    %c0_123 = arith.constant 0 : index
    %149 = vector.load %arg3[%c0_121, %c35, %c0_122, %c0_123] : memref<1x36x16x16xf32, #tpu.memory_space<vmem>>, vector<1x1x16x16xf32>
    %150 = vector.shape_cast %149 : vector<1x1x16x16xf32> to vector<16x16xf32>
    %151 = vector.shape_cast %148 : vector<16x16xf32> to vector<1x1x16x16xf32>
    tpu.vector_store %arg3[%c0_121, %c35, %c0_122, %c0_123], %151 {strides = array<i32>} : memref<1x36x16x16xf32, #tpu.memory_space<vmem>>, vector<1x1x16x16xf32>,
    return
  }
  func.func @transform_0(%arg0: i32, %arg1: i32) -> (i32, i32, i32, i32) {
    %c0_i32 = arith.constant 0 : i32
    %c0_i32_0 = arith.constant 0 : i32
    %c0_i32_1 = arith.constant 0 : i32
    return %arg0, %arg1, %c0_i32, %c0_i32_0 : i32, i32, i32, i32
  }
  func.func @transform_1(%arg0: i32, %arg1: i32) -> (i32, i32, i32, i32) {
    %c0_i32 = arith.constant 0 : i32
    %c0_i32_0 = arith.constant 0 : i32
    %c0_i32_1 = arith.constant 0 : i32
    return %arg0, %arg1, %c0_i32, %c0_i32_0 : i32, i32, i32, i32
  }
}

</mosaic_0001>

<llo_original>
// kernel: _lambda_.1
$region0: #{_lambda_.1}
  #allocation0 [shape = 'u32[]', space=smem, size = 0x4, offset = 0x4, fixed_abs, tag = 'smem constant byte address 0x4 - core index']
  #allocation1 [shape = 'u32[144,128]{1,0:T(1,128)}', space=vmem, size = 0x12000, scoped, tag = 'internal scratch']
  %s0 = inlined_call_operand.vmem [shape: f32[2,4,18,18], index: 0, kind: input, shape index: {}]
  %s1 = inlined_call_operand.vmem [shape: f32[2,36,16,16], index: 1, kind: output, shape index: {}]
  %s2 = sld [smem:[#allocation0]]
  $region37: #{_lambda_.1} parent=0
    _
  %s4 = ssub.s32 1, %s2
  %s5 = scalar_select 0, %s4, %s2
  loop: start=0, step=1, limit=4
  $region2: #{_lambda_.1} parent=0 // loop_pre_header
    _
  $region3: #{_lambda_.1} parent=0 // loop_header
    %s7 = sphi 0, %s11
    %p8 = scmp.ge.s32.totalorder %s7, 4
    %s14 = sphi 0, %s26
    %s15 = sphi 0, %s22
    %s16 = sphi 0, %s14
    %s17 = sphi 0, %s15
    %s18 = sphi 0, %s16
    %s19 = sphi 0, %s17
    %s31 = sphi 0, %s33
    %s34 = sphi 0, %s31
    %s35 = sphi 0, %s34
    %s51 = sphi 0, %s35
    %s59 = sphi 0, %s61
    %s62 = sphi 0, %s59
    %s63 = sphi 0, %s62
    %s79 = sphi 0, %s63
  $region4: #{_lambda_.1} parent=0 // loop_header_branch
    %10 = sbr.rel (%p8) target = $region8
  $region5: #{_lambda_.1} parent=0 // loop_body
    %s12 = ssub.s32 %s7, 1
    %s13 = ssub.s32 %s7, 2
    %s20 = sadd.s32 1, %s15
    %p21 = scmp.ge.s32.totalorder %s20, 1
    %s22 = scalar_select %p21, 0, %s20
    %s23 = sadd.s32 1, %s14
    %s24 = scalar_select %p21, %s23, %s14
    %p25 = scmp.ge.s32.totalorder %s24, 2
    %s26 = scalar_select %p25, 0, %s24
    %s27 = ssub.s32 %s14, %s26
    %s28 = ssub.s32 %s15, %s22
    %s29 = sor.u32 %s27, %s28
    %p30 = scmp.eq.s32.totalorder %s29, 0
    %s32 = sadd.s32 %s31, 1
    %s33 = scalar_select %p30, %s31, %s32
    %p36 = pneg %p30
    %p37 = scmp.eq.s32.totalorder %s7, 1
    %p38 = por %p36, %p37
    %p39 = scmp.ne.s32.totalorder %s31, %s34
    %p40 = scmp.eq.s32.totalorder %s7, 0
    %p41 = por %p39, %p40
    %p42 = scmp.ne.s32.totalorder %s31, %s34
    %p43 = scmp.eq.s32.totalorder %s12, 1
    %p44 = por %p42, %p43
    %p45 = scmp.ne.s32.totalorder %s34, %s35
    %p46 = scmp.eq.s32.totalorder %s12, 0
    %p47 = por %p45, %p46
    %p48 = scmp.ne.s32.totalorder %s34, %s35
    %p49 = scmp.eq.s32.totalorder %s13, 1
    %p50 = por %p48, %p49
    %p52 = scmp.ne.s32.totalorder %s35, %s51
    %p53 = scmp.eq.s32.totalorder %s13, 0
    %p54 = por %p52, %p53
    %s55 = ssub.s32 %s14, %s26
    %s56 = ssub.s32 %s15, %s22
    %s57 = sor.u32 %s55, %s56
    %p58 = scmp.eq.s32.totalorder %s57, 0
    %s60 = sadd.s32 %s59, 1
    %s61 = scalar_select %p58, %s59, %s60
    %p64 = pneg %p58
    %p65 = scmp.eq.s32.totalorder %s7, 1
    %p66 = por %p64, %p65
    %p67 = scmp.ne.s32.totalorder %s59, %s62
    %p68 = scmp.eq.s32.totalorder %s7, 0
    %p69 = por %p67, %p68
    %p70 = scmp.ne.s32.totalorder %s59, %s62
    %p71 = scmp.eq.s32.totalorder %s12, 1
    %p72 = por %p70, %p71
    %p73 = scmp.ne.s32.totalorder %s62, %s63
    %p74 = scmp.eq.s32.totalorder %s12, 0
    %p75 = por %p73, %p74
    %p76 = scmp.ne.s32.totalorder %s62, %s63
    %p77 = scmp.eq.s32.totalorder %s13, 1
    %p78 = por %p76, %p77
    %p80 = scmp.ne.s32.totalorder %s63, %s79
    %p81 = scmp.eq.s32.totalorder %s13, 0
    %p82 = por %p80, %p81
    %p83 = scmp.le.s32.totalorder 1, %s7
    %p84 = scmp.lt.s32.totalorder %s7, 3
    %p85 = pnand %p83, %p84
    %p86 = pneg %p85
    // Predicated region
    $region9: #{_lambda_.1} parent=5 // pred_check
      _
    $region10: #{_lambda_.1} parent=5 // pred_check_branch
      %88 = sbr.rel (%p85) target = $region12
    $region11: #{_lambda_.1} parent=5 // pred_region
      %s89 = ssub.s32 %s7, 1
    $region12: #{_lambda_.1} parent=5 // pred_fallthru
      _
    %p90 = scmp.lt.s32.totalorder %s7, 2
    // Predicated region
    $region13: #{_lambda_.1} parent=5 // pred_check
      %p91 = pneg %p90
    $region14: #{_lambda_.1} parent=5 // pred_check_branch
      %93 = sbr.rel (%p91) target = $region16
    $region15: #{_lambda_.1} parent=5 // pred_region
      // Predicated region
      $region17: #{_lambda_.1} parent=15 // pred_check
        %p94 = pneg %p41
      $region18: #{_lambda_.1} parent=15 // pred_check_branch
        %96 = sbr.rel (%p94) target = $region20
      $region19: #{_lambda_.1} parent=15 // pred_region
        %s97 = smul.u32 4, %s15
        %p98 = scmp.lt.s32.totalorder %s14, 1
        %s99 = scalar_select %p98, %s14, 1
        %p100 = scmp.lt.s32.totalorder %s97, 3
        %s101 = scalar_select %p100, %s97, 3
        %s102 = smul.addr %s101, 3
        %s103 = smul.addr %s99, 12
        %s104 = sadd.s32 %s102, %s103
        %s105 = smul.addr %s104, 8
        %s106 = scalar_lea.vmem %s0, %s105
        %s107 = smul.u32 4, %s15
      $region20: #{_lambda_.1} parent=15 // pred_fallthru
        _
    $region16: #{_lambda_.1} parent=5 // pred_fallthru
      _
    %p108 = scmp.le.s32.totalorder 1, %s7
    %p109 = scmp.lt.s32.totalorder %s7, 3
    %p110 = pnand %p108, %p109
    %p111 = pneg %p110
    // Predicated region
    $region21: #{_lambda_.1} parent=5 // pred_check
      _
    $region22: #{_lambda_.1} parent=5 // pred_check_branch
      %113 = sbr.rel (%p110) target = $region24
    $region23: #{_lambda_.1} parent=5 // pred_region
      %s114 = ssub.s32 %s7, 1
      %s115 = smul.u32 4, %s17
      %p116 = scmp.lt.s32.totalorder %s16, 1
      %s117 = scalar_select %p116, %s16, 1
      %p118 = scmp.lt.s32.totalorder %s115, 3
      %s119 = scalar_select %p118, %s115, 3
      %s120 = smul.addr %s119, 3
      %s121 = smul.addr %s117, 12
      %s122 = sadd.s32 %s120, %s121
      %s123 = smul.addr %s122, 8
      %s124 = scalar_lea.vmem %s0, %s123
      %p125 = pneg %p47
      %p126 = pneg %p44
      %p127 = pneg %p75
      %p128 = pneg %p72
      %s129 = smul.u32 36, %s17
      %p130 = scmp.lt.s32.totalorder %s16, 1
      %s131 = scalar_select %p130, %s16, 1
      %p132 = scmp.lt.s32.totalorder %s129, 35
      %s133 = scalar_select %p132, %s129, 35
      %s134 = smul.addr %s133, 2
      %s135 = smul.addr %s131, 72
      %s136 = sadd.s32 %s134, %s135
      %s137 = smul.addr %s136, 8
      %s138 = scalar_lea.vmem %s1, %s137
      %s139 = smul.u32 4, %s17
      %p140 = scmp.lt.s32.totalorder %s16, 1
      %s141 = scalar_select %p140, %s16, 1
      %p142 = scmp.lt.s32.totalorder %s139, 3
      %s143 = scalar_select %p142, %s139, 3
      %s144 = smul.addr %s143, 3
      %s145 = smul.addr %s141, 12
      %s146 = sadd.s32 %s144, %s145
      %s147 = smul.addr %s146, 8
      %s148 = scalar_lea.vmem %s0, %s147
      %s149 = smul.u32 4, %s17
      %s150 = smul.u32 36, %s17
      %p151 = scmp.lt.s32.totalorder %s16, 1
      %s152 = scalar_select %p151, %s16, 1
      %p153 = scmp.lt.s32.totalorder %s150, 35
      %s154 = scalar_select %p153, %s150, 35
      %s155 = smul.addr %s154, 2
      %s156 = smul.addr %s152, 72
      %s157 = sadd.s32 %s155, %s156
      %s158 = smul.addr %s157, 8
      %s159 = scalar_lea.vmem %s1, %s158
      %s160 = smul.u32 36, %s17
      %v161 = vld [vmem:[%s148] sm:$0xff]
      %v162 = vld [vmem:[%s148 + $0x8] sm:$0xff]
      %v163 = vld [vmem:[%s148 + $0x10] sm:$0x3]
      %vm164 = vcmask 130048
      %165 = vst.msk [vmem:[%s159] sm:$0xff] %vm164, %v161
      %166 = vst.msk [vmem:[%s159 + $0x8] sm:$0xff] %vm164, %v162
      %169 = vrot.lane.b32.xlu0 %v161, 127
      %v170 = vpop.permute.xlu0 %169
      %171 = vrot.lane.b32.xlu0 %v162, 127
      %v172 = vpop.permute.xlu0 %171
      %s175 = scalar_lea.vmem %s159, 16
      %176 = vst.msk [vmem:[%s175] sm:$0xff] %vm164, %v170
      %177 = vst.msk [vmem:[%s175 + $0x8] sm:$0xff] %vm164, %v172
      %178 = vrot.lane.b32.xlu0 %v161, 126
      %v179 = vpop.permute.xlu0 %178
      %180 = vrot.lane.b32.xlu0 %v162, 126
      %v181 = vpop.permute.xlu0 %180
      %s184 = scalar_lea.vmem %s159, 32
      %185 = vst.msk [vmem:[%s184] sm:$0xff] %vm164, %v179
      %186 = vst.msk [vmem:[%s184 + $0x8] sm:$0xff] %vm164, %v181
      %s187 = scalar_lea.vmem %s159, 48
      %vm188 = vcmask 130049
      %189 = vst.msk [vmem:[%s187 - $0x1] sm:$0xfe] %vm188, %v161
      %190 = vst.msk [vmem:[%s187 + $0x7] sm:$0xff] %vm164, %v162
      %vm191 = vcmask 122880
      %192 = vst.msk [vmem:[%s187 + $0xf] sm:$0x1] %vm191, %v163
      %194 = vrot.lane.b32.xlu0 %v163, 127
      %v195 = vpop.permute.xlu0 %194
      %s197 = scalar_lea.vmem %s159, 64
      %198 = vst.msk [vmem:[%s197 - $0x1] sm:$0xfe] %vm188, %v170
      %199 = vst.msk [vmem:[%s197 + $0x7] sm:$0xff] %vm164, %v172
      %200 = vst.msk [vmem:[%s197 + $0xf] sm:$0x1] %vm191, %v195
      %201 = vrot.lane.b32.xlu0 %v163, 126
      %v202 = vpop.permute.xlu0 %201
      %s204 = scalar_lea.vmem %s159, 80
      %205 = vst.msk [vmem:[%s204 - $0x1] sm:$0xfe] %vm188, %v179
      %206 = vst.msk [vmem:[%s204 + $0x7] sm:$0xff] %vm164, %v181
      %207 = vst.msk [vmem:[%s204 + $0xf] sm:$0x1] %vm191, %v202
      %s208 = scalar_lea.vmem %s159, 96
      %vm209 = vcmask 130050
      %210 = vst.msk [vmem:[%s208 - $0x2] sm:$0xfc] %vm209, %v161
      %211 = vst.msk [vmem:[%s208 + $0x6] sm:$0xff] %vm164, %v162
      %vm212 = vcmask 123904
      %213 = vst.msk [vmem:[%s208 + $0xe] sm:$0x3] %vm212, %v163
      %s214 = scalar_lea.vmem %s159, 112
      %215 = vst.msk [vmem:[%s214 - $0x2] sm:$0xfc] %vm209, %v170
      %216 = vst.msk [vmem:[%s214 + $0x6] sm:$0xff] %vm164, %v172
      %217 = vst.msk [vmem:[%s214 + $0xe] sm:$0x3] %vm212, %v195
      %s218 = scalar_lea.vmem %s159, 128
      %219 = vst.msk [vmem:[%s218 - $0x2] sm:$0xfc] %vm209, %v179
      %220 = vst.msk [vmem:[%s218 + $0x6] sm:$0xff] %vm164, %v181
      %221 = vst.msk [vmem:[%s218 + $0xe] sm:$0x3] %vm212, %v202
      %s222 = scalar_lea.vmem %s148, 24
      %v223 = vld [vmem:[%s222] sm:$0xff]
      %v224 = vld [vmem:[%s222 + $0x8] sm:$0xff]
      %v225 = vld [vmem:[%s222 + $0x10] sm:$0x3]
      %s226 = scalar_lea.vmem %s159, 144
      %227 = vst.msk [vmem:[%s226] sm:$0xff] %vm164, %v223
      %228 = vst.msk [vmem:[%s226 + $0x8] sm:$0xff] %vm164, %v224
      %231 = vrot.lane.b32.xlu0 %v223, 127
      %v232 = vpop.permute.xlu0 %231
      %233 = vrot.lane.b32.xlu0 %v224, 127
      %v234 = vpop.permute.xlu0 %233
      %s237 = scalar_lea.vmem %s159, 160
      %238 = vst.msk [vmem:[%s237] sm:$0xff] %vm164, %v232
      %239 = vst.msk [vmem:[%s237 + $0x8] sm:$0xff] %vm164, %v234
      %240 = vrot.lane.b32.xlu0 %v223, 126
      %v241 = vpop.permute.xlu0 %240
      %242 = vrot.lane.b32.xlu0 %v224, 126
      %v243 = vpop.permute.xlu0 %242
      %s246 = scalar_lea.vmem %s159, 176
      %247 = vst.msk [vmem:[%s246] sm:$0xff] %vm164, %v241
      %248 = vst.msk [vmem:[%s246 + $0x8] sm:$0xff] %vm164, %v243
      %s249 = scalar_lea.vmem %s159, 192
      %250 = vst.msk [vmem:[%s249 - $0x1] sm:$0xfe] %vm188, %v223
      %251 = vst.msk [vmem:[%s249 + $0x7] sm:$0xff] %vm164, %v224
      %252 = vst.msk [vmem:[%s249 + $0xf] sm:$0x1] %vm191, %v225
      %254 = vrot.lane.b32.xlu0 %v225, 127
      %v255 = vpop.permute.xlu0 %254
      %s257 = scalar_lea.vmem %s159, 208
      %258 = vst.msk [vmem:[%s257 - $0x1] sm:$0xfe] %vm188, %v232
      %259 = vst.msk [vmem:[%s257 + $0x7] sm:$0xff] %vm164, %v234
      %260 = vst.msk [vmem:[%s257 + $0xf] sm:$0x1] %vm191, %v255
      %261 = vrot.lane.b32.xlu0 %v225, 126
      %v262 = vpop.permute.xlu0 %261
      %s264 = scalar_lea.vmem %s159, 224
      %265 = vst.msk [vmem:[%s264 - $0x1] sm:$0xfe] %vm188, %v241
      %266 = vst.msk [vmem:[%s264 + $0x7] sm:$0xff] %vm164, %v243
      %267 = vst.msk [vmem:[%s264 + $0xf] sm:$0x1] %vm191, %v262
      %s268 = scalar_lea.vmem %s159, 240
      %269 = vst.msk [vmem:[%s268 - $0x2] sm:$0xfc] %vm209, %v223
      %270 = vst.msk [vmem:[%s268 + $0x6] sm:$0xff] %vm164, %v224
      %271 = vst.msk [vmem:[%s268 + $0xe] sm:$0x3] %vm212, %v225
      %s272 = scalar_lea.vmem %s159, 256
      %273 = vst.msk [vmem:[%s272 - $0x2] sm:$0xfc] %vm209, %v232
      %274 = vst.msk [vmem:[%s272 + $0x6] sm:$0xff] %vm164, %v234
      %275 = vst.msk [vmem:[%s272 + $0xe] sm:$0x3] %vm212, %v255
      %s276 = scalar_lea.vmem %s159, 272
      %277 = vst.msk [vmem:[%s276 - $0x2] sm:$0xfc] %vm209, %v241
      %278 = vst.msk [vmem:[%s276 + $0x6] sm:$0xff] %vm164, %v243
      %279 = vst.msk [vmem:[%s276 + $0xe] sm:$0x3] %vm212, %v262
      %s280 = scalar_lea.vmem %s148, 48
      %v281 = vld [vmem:[%s280] sm:$0xff]
      %v282 = vld [vmem:[%s280 + $0x8] sm:$0xff]
      %v283 = vld [vmem:[%s280 + $0x10] sm:$0x3]
      %s284 = scalar_lea.vmem %s159, 288
      %285 = vst.msk [vmem:[%s284] sm:$0xff] %vm164, %v281
      %286 = vst.msk [vmem:[%s284 + $0x8] sm:$0xff] %vm164, %v282
      %289 = vrot.lane.b32.xlu0 %v281, 127
      %v290 = vpop.permute.xlu0 %289
      %291 = vrot.lane.b32.xlu0 %v282, 127
      %v292 = vpop.permute.xlu0 %291
      %s295 = scalar_lea.vmem %s159, 304
      %296 = vst.msk [vmem:[%s295] sm:$0xff] %vm164, %v290
      %297 = vst.msk [vmem:[%s295 + $0x8] sm:$0xff] %vm164, %v292
      %298 = vrot.lane.b32.xlu0 %v281, 126
      %v299 = vpop.permute.xlu0 %298
      %300 = vrot.lane.b32.xlu0 %v282, 126
      %v301 = vpop.permute.xlu0 %300
      %s304 = scalar_lea.vmem %s159, 320
      %305 = vst.msk [vmem:[%s304] sm:$0xff] %vm164, %v299
      %306 = vst.msk [vmem:[%s304 + $0x8] sm:$0xff] %vm164, %v301
      %s307 = scalar_lea.vmem %s159, 336
      %308 = vst.msk [vmem:[%s307 - $0x1] sm:$0xfe] %vm188, %v281
      %309 = vst.msk [vmem:[%s307 + $0x7] sm:$0xff] %vm164, %v282
      %310 = vst.msk [vmem:[%s307 + $0xf] sm:$0x1] %vm191, %v283
      %312 = vrot.lane.b32.xlu0 %v283, 127
      %v313 = vpop.permute.xlu0 %312
      %s315 = scalar_lea.vmem %s159, 352
      %316 = vst.msk [vmem:[%s315 - $0x1] sm:$0xfe] %vm188, %v290
      %317 = vst.msk [vmem:[%s315 + $0x7] sm:$0xff] %vm164, %v292
      %318 = vst.msk [vmem:[%s315 + $0xf] sm:$0x1] %vm191, %v313
      %319 = vrot.lane.b32.xlu0 %v283, 126
      %v320 = vpop.permute.xlu0 %319
      %s322 = scalar_lea.vmem %s159, 368
      %323 = vst.msk [vmem:[%s322 - $0x1] sm:$0xfe] %vm188, %v299
      %324 = vst.msk [vmem:[%s322 + $0x7] sm:$0xff] %vm164, %v301
      %325 = vst.msk [vmem:[%s322 + $0xf] sm:$0x1] %vm191, %v320
      %s326 = scalar_lea.vmem %s159, 384
      %327 = vst.msk [vmem:[%s326 - $0x2] sm:$0xfc] %vm209, %v281
      %328 = vst.msk [vmem:[%s326 + $0x6] sm:$0xff] %vm164, %v282
      %329 = vst.msk [vmem:[%s326 + $0xe] sm:$0x3] %vm212, %v283
      %s330 = scalar_lea.vmem %s159, 400
      %331 = vst.msk [vmem:[%s330 - $0x2] sm:$0xfc] %vm209, %v290
      %332 = vst.msk [vmem:[%s330 + $0x6] sm:$0xff] %vm164, %v292
      %333 = vst.msk [vmem:[%s330 + $0xe] sm:$0x3] %vm212, %v313
      %s334 = scalar_lea.vmem %s159, 416
      %335 = vst.msk [vmem:[%s334 - $0x2] sm:$0xfc] %vm209, %v299
      %336 = vst.msk [vmem:[%s334 + $0x6] sm:$0xff] %vm164, %v301
      %337 = vst.msk [vmem:[%s334 + $0xe] sm:$0x3] %vm212, %v320
      %s338 = scalar_lea.vmem %s148, 72
      %v339 = vld [vmem:[%s338] sm:$0xff]
      %v340 = vld [vmem:[%s338 + $0x8] sm:$0xff]
      %v341 = vld [vmem:[%s338 + $0x10] sm:$0x3]
      %s342 = scalar_lea.vmem %s159, 432
      %343 = vst.msk [vmem:[%s342] sm:$0xff] %vm164, %v339
      %344 = vst.msk [vmem:[%s342 + $0x8] sm:$0xff] %vm164, %v340
      %347 = vrot.lane.b32.xlu0 %v339, 127
      %v348 = vpop.permute.xlu0 %347
      %349 = vrot.lane.b32.xlu0 %v340, 127
      %v350 = vpop.permute.xlu0 %349
      %s353 = scalar_lea.vmem %s159, 448
      %354 = vst.msk [vmem:[%s353] sm:$0xff] %vm164, %v348
      %355 = vst.msk [vmem:[%s353 + $0x8] sm:$0xff] %vm164, %v350
      %356 = vrot.lane.b32.xlu0 %v339, 126
      %v357 = vpop.permute.xlu0 %356
      %358 = vrot.lane.b32.xlu0 %v340, 126
      %v359 = vpop.permute.xlu0 %358
      %s362 = scalar_lea.vmem %s159, 464
      %363 = vst.msk [vmem:[%s362] sm:$0xff] %vm164, %v357
      %364 = vst.msk [vmem:[%s362 + $0x8] sm:$0xff] %vm164, %v359
      %s365 = scalar_lea.vmem %s159, 480
      %366 = vst.msk [vmem:[%s365 - $0x1] sm:$0xfe] %vm188, %v339
      %367 = vst.msk [vmem:[%s365 + $0x7] sm:$0xff] %vm164, %v340
      %368 = vst.msk [vmem:[%s365 + $0xf] sm:$0x1] %vm191, %v341
      %370 = vrot.lane.b32.xlu0 %v341, 127
      %v371 = vpop.permute.xlu0 %370
      %s373 = scalar_lea.vmem %s159, 496
      %374 = vst.msk [vmem:[%s373 - $0x1] sm:$0xfe] %vm188, %v348
      %375 = vst.msk [vmem:[%s373 + $0x7] sm:$0xff] %vm164, %v350
      %376 = vst.msk [vmem:[%s373 + $0xf] sm:$0x1] %vm191, %v371
      %377 = vrot.lane.b32.xlu0 %v341, 126
      %v378 = vpop.permute.xlu0 %377
      %s380 = scalar_lea.vmem %s159, 512
      %381 = vst.msk [vmem:[%s380 - $0x1] sm:$0xfe] %vm188, %v357
      %382 = vst.msk [vmem:[%s380 + $0x7] sm:$0xff] %vm164, %v359
      %383 = vst.msk [vmem:[%s380 + $0xf] sm:$0x1] %vm191, %v378
      %s384 = scalar_lea.vmem %s159, 528
      %385 = vst.msk [vmem:[%s384 - $0x2] sm:$0xfc] %vm209, %v339
      %386 = vst.msk [vmem:[%s384 + $0x6] sm:$0xff] %vm164, %v340
      %387 = vst.msk [vmem:[%s384 + $0xe] sm:$0x3] %vm212, %v341
      %s388 = scalar_lea.vmem %s159, 544
      %389 = vst.msk [vmem:[%s388 - $0x2] sm:$0xfc] %vm209, %v348
      %390 = vst.msk [vmem:[%s388 + $0x6] sm:$0xff] %vm164, %v350
      %391 = vst.msk [vmem:[%s388 + $0xe] sm:$0x3] %vm212, %v371
      %s392 = scalar_lea.vmem %s159, 560
      %393 = vst.msk [vmem:[%s392 - $0x2] sm:$0xfc] %vm209, %v357
      %394 = vst.msk [vmem:[%s392 + $0x6] sm:$0xff] %vm164, %v359
      %395 = vst.msk [vmem:[%s392 + $0xe] sm:$0x3] %vm212, %v378
      %s396 = smul.u32 36, %s17
      %p397 = scmp.lt.s32.totalorder %s16, 1
      %s398 = scalar_select %p397, %s16, 1
      %p399 = scmp.lt.s32.totalorder %s396, 35
      %s400 = scalar_select %p399, %s396, 35
      %s401 = smul.addr %s400, 2
      %s402 = smul.addr %s398, 72
      %s403 = sadd.s32 %s401, %s402
      %s404 = smul.addr %s403, 8
      %s405 = scalar_lea.vmem %s1, %s404
      // Predicated region
      $region25: #{_lambda_.1} parent=23 // pred_check
        %p406 = pneg %p72
      $region26: #{_lambda_.1} parent=23 // pred_check_branch
        %408 = sbr.rel (%p406) target = $region28
      $region27: #{_lambda_.1} parent=23 // pred_region
        %s409 = smul.u32 36, %s17
      $region28: #{_lambda_.1} parent=23 // pred_fallthru
        _
    $region24: #{_lambda_.1} parent=5 // pred_fallthru
      _
    %p410 = scmp.le.s32.totalorder 2, %s7
    // Predicated region
    $region29: #{_lambda_.1} parent=5 // pred_check
      %p411 = pneg %p410
    $region30: #{_lambda_.1} parent=5 // pred_check_branch
      %413 = sbr.rel (%p411) target = $region32
    $region31: #{_lambda_.1} parent=5 // pred_region
      %s414 = ssub.s32 %s7, 2
      // Predicated region
      $region33: #{_lambda_.1} parent=31 // pred_check
        %p415 = pneg %p78
      $region34: #{_lambda_.1} parent=31 // pred_check_branch
        %417 = sbr.rel (%p415) target = $region36
      $region35: #{_lambda_.1} parent=31 // pred_region
        %s418 = smul.u32 36, %s19
        %p419 = scmp.lt.s32.totalorder %s18, 1
        %s420 = scalar_select %p419, %s18, 1
        %p421 = scmp.lt.s32.totalorder %s418, 35
        %s422 = scalar_select %p421, %s418, 35
        %s423 = smul.addr %s422, 2
        %s424 = smul.addr %s420, 72
        %s425 = sadd.s32 %s423, %s424
        %s426 = smul.addr %s425, 8
        %s427 = scalar_lea.vmem %s1, %s426
      $region36: #{_lambda_.1} parent=31 // pred_fallthru
        _
    $region32: #{_lambda_.1} parent=5 // pred_fallthru
      _
  $region6: #{_lambda_.1} parent=0 // loop_footer
    %s11 = sadd.s32 1, %s7
  $region7: #{_lambda_.1} parent=0 // loop_footer_branch
    %6 = sbr.rel target = $region3
  $region8: #{_lambda_.1} parent=0 // loop_exit
    _

</llo_original>
